<compile_context>
chip_gen: v7x
topology: tpu7x:2x2x1
jax: 0.10.0
libtpu: 0.0.40
codegen_flags: <defaults>
</compile_context>

<pallas_src>
import jax
import jax.numpy as jnp
from jax.experimental import pallas as pl
from jax.experimental.pallas import tpu as pltpu


def _clipali_kernel(x_ref, w_ref, t_ref, cos_ref, acc_ref):
    """One (row-block, K-block) step of the fused CLIP-ALI forward.

    x_ref   : [bm, tk]        bf16  stacked (edited ++ original) image rows, K slice
    w_ref   : [tk, D]         bf16  image-encoder projection, K slice
    t_ref   : [1, D]          f32   pre-normalized text embedding
    cos_ref : [1, 1, bm]      f32   per-row cosine similarities (lane-dense)
    acc_ref : [bm, D]         f32   VMEM accumulator for the image embeddings
    """
    k = pl.program_id(1)

    @pl.when(k == 0)
    def _():
        acc_ref[...] = jnp.zeros_like(acc_ref)

    acc_ref[...] += jnp.dot(x_ref[...], w_ref[...],
                            preferred_element_type=jnp.float32)

    @pl.when(k == pl.num_programs(1) - 1)
    def _():
        emb = acc_ref[...]                                        # [bm, D] f32
        inv_norm = jax.lax.rsqrt(
            jnp.sum(emb * emb, axis=-1, keepdims=True) + 1e-12)
        emb_n = emb * inv_norm                                    # [bm, D]
        # Lane-dense [1, bm] cosine row: contract D of (1,D) with (bm,D) on the
        # MXU — result already has rows on the lane axis, no masked stores.
        cos_row = jax.lax.dot_general(
            t_ref[...], emb_n,
            dimension_numbers=(((1,), (1,)), ((), ())),
            preferred_element_type=jnp.float32)                   # [1, bm]
        cos_ref[...] = cos_row.reshape(cos_ref.shape)


def _ceil_to(x, m):
    return ((x + m - 1) // m) * m


def _pad_axis_to(x, target, axis):
    pad = target - x.shape[axis]
    if pad <= 0:
        return x
    widths = [(0, 0)] * x.ndim
    widths[axis] = (0, pad)
    return jnp.pad(x, widths)


def _select_tiles(rows, feat, d_pad):
    """Pick (bm, rows_pad, tk) from a VMEM budget.

    Single row block when the stacked batch is small (weights streamed from HBM
    exactly once); otherwise 256-row blocks (MXU-filling, shards across v7x TCs).
    """
    rows8 = max(8, _ceil_to(rows, 8))
    if rows8 <= 512:
        bm, rows_pad = rows8, rows8
    else:
        bm = 256
        rows_pad = _ceil_to(rows, bm)

    feat128 = _ceil_to(feat, 128)
    budget = 32 * 1024 * 1024                       # tile budget, safe on all gens
    fixed = bm * d_pad * 4 + 2 * d_pad * 4 + 2 * bm * 4   # acc + txt/out buffers
    per_tk = 2 * (bm * 2) + 2 * (d_pad * 2)         # x + w tiles, double-buffered, bf16
    tk = max(128, ((budget - fixed) // per_tk) // 128 * 128)
    tk = min(tk, 4096, feat128)
    return bm, rows_pad, tk


def clip_ali(images, originals, text, w_img, w_txt):
    """images, originals: [N, C, H, W]; text: [1, S, Dt]."""
    if images.shape[0] != originals.shape[0]:
        raise ValueError("Supply an equal number of edits and originals")
    n = images.shape[0]

    # Stack edited + original rows -> one matmul.  Cast to bf16 BEFORE the
    # concatenate so no full-size f32 copy of the stacked input hits HBM.
    x = jnp.concatenate(
        [images.reshape(n, -1).astype(jnp.bfloat16),
         originals.reshape(n, -1).astype(jnp.bfloat16)], axis=0)   # [2N, F] bf16
    rows, feat = x.shape
    d = w_img.shape[1]
    d_pad = _ceil_to(d, 128)

    # Batch-independent text embedding, hoisted out of the kernel (f32).
    txt = text.reshape(1, -1).astype(jnp.float32)
    txt_emb = jnp.dot(txt, w_txt.astype(jnp.float32),
                      preferred_element_type=jnp.float32)
    txt_n = txt_emb * jax.lax.rsqrt(
        jnp.sum(txt_emb * txt_emb, axis=-1, keepdims=True) + 1e-12)  # [1, D]
    txt_n = _pad_axis_to(txt_n, d_pad, 1)                            # [1, Dp]

    bm, rows_pad, tk = _select_tiles(rows, feat, d_pad)
    feat_pad = _ceil_to(feat, tk)

    x_bf = _pad_axis_to(_pad_axis_to(x, rows_pad, 0), feat_pad, 1)            # [Rp, Fp]
    w_bf = _pad_axis_to(_pad_axis_to(w_img.astype(jnp.bfloat16), feat_pad, 0),
                        d_pad, 1)                                             # [Fp, Dp]

    num_row_blocks = rows_pad // bm
    grid = (num_row_blocks, feat_pad // tk)

    # VMEM footprint of the pipeline (double-buffered inputs/outputs + scratch);
    # cap at 48 MiB to leave headroom on v7x's 64 MiB physical VMEM.
    vmem_bytes = (2 * bm * tk * 2 + 2 * tk * d_pad * 2 + bm * d_pad * 4
                  + 2 * d_pad * 4 + 2 * bm * 4)
    vmem_limit = min(48 * 1024 * 1024,
                     max(16 * 1024 * 1024, (vmem_bytes * 3) // 2))

    cos = pl.pallas_call(
        _clipali_kernel,
        out_shape=jax.ShapeDtypeStruct((num_row_blocks, 1, bm), jnp.float32),
        grid_spec=pltpu.PrefetchScalarGridSpec(
            num_scalar_prefetch=0,
            grid=grid,
            in_specs=[
                pl.BlockSpec((bm, tk), lambda i, k: (i, k)),       # image rows
                pl.BlockSpec((tk, d_pad), lambda i, k: (k, 0)),    # encoder weights
                pl.BlockSpec((1, d_pad), lambda i, k: (0, 0)),     # text embedding
            ],
            out_specs=pl.BlockSpec((1, 1, bm), lambda i, k: (i, 0, 0)),
            scratch_shapes=[pltpu.VMEM((bm, d_pad), jnp.float32)],
        ),
        compiler_params=pltpu.CompilerParams(
            dimension_semantics=("parallel", "arbitrary"),
            vmem_limit_bytes=int(vmem_limit),
        ),
        cost_estimate=pl.CostEstimate(
            flops=2 * rows_pad * feat_pad * d_pad
                  + 2 * num_row_blocks * bm * d_pad,
            transcendentals=0,
            bytes_accessed=(rows_pad * feat_pad * 2                 # x (bf16), once
                            + num_row_blocks * feat_pad * d_pad * 2  # w per row block
                            + num_row_blocks * d_pad * 4             # text per row block
                            + num_row_blocks * bm * 4),              # cosines out
        ),
    )(x_bf, w_bf, txt_n)

    cos = cos.reshape(-1)[:rows]
    cos_img, cos_orig = cos[:n], cos[n:]
    # clip_loss = 1 - cos  =>  loss(orig) - loss(img) = cos(img) - cos(orig)
    return jnp.mean(cos_img - cos_orig)


def _reference(images, originals, text, w_img, w_txt):
    """Pure-JAX reference with identical (bf16 matmul, f32 accumulate) numerics."""
    n = images.shape[0]
    x = jnp.concatenate([images.reshape(n, -1), originals.reshape(n, -1)], 0)
    emb = jnp.dot(x.astype(jnp.bfloat16), w_img.astype(jnp.bfloat16),
                  preferred_element_type=jnp.float32)
    emb_n = emb * jax.lax.rsqrt(jnp.sum(emb * emb, -1, keepdims=True) + 1e-12)
    txt = text.reshape(1, -1).astype(jnp.float32)
    te = jnp.dot(txt, w_txt.astype(jnp.float32),
                 preferred_element_type=jnp.float32)
    te_n = te * jax.lax.rsqrt(jnp.sum(te * te, -1, keepdims=True) + 1e-12)
    cos = jnp.sum(emb_n * te_n, -1)
    return jnp.mean(cos[:n] - cos[n:])


if __name__ == "__main__":
    # Small shapes: N=2 pairs, C=4 channels, 16x16 spatial, text seq=8, hidden=32.
    N, C, H, W = 2, 4, 16, 16
    S, Dt = 8, 32
    D = 128  # embedding dim

    key = jax.random.PRNGKey(0)
    k_img, k_orig, k_txt, k_wi, k_wt = jax.random.split(key, 5)

    images = jax.random.normal(k_img, (N, C, H, W), dtype=jnp.float32)
    originals = jax.random.normal(k_orig, (N, C, H, W), dtype=jnp.float32)
    text = jax.random.normal(k_txt, (1, S, Dt), dtype=jnp.float32)

    # Deterministic synthetic encoder weights.
    F = C * H * W
    T = S * Dt
    w_img = jax.random.normal(k_wi, (F, D), dtype=jnp.float32) * (1.0 / jnp.sqrt(F))
    w_txt = jax.random.normal(k_wt, (T, D), dtype=jnp.float32) * (1.0 / jnp.sqrt(T))

    result = clip_ali(images, originals, text, w_img, w_txt)
    jax.block_until_ready(result)

    ref = _reference(images, originals, text, w_img, w_txt)
    assert jnp.allclose(result, ref, atol=1e-4, rtol=1e-4), (result, ref)

    print("KERNEL_OK")
</pallas_src>

<mosaic_0001>
module attributes {stable_mosaic.version = 11 : i64} {
  func.func @_clipali_kernel(%arg0: i32, %arg1: i32, %arg2: memref<8x1024xbf16, #tpu.memory_space<vmem>>, %arg3: memref<1024x128xbf16, #tpu.memory_space<vmem>>, %arg4: memref<1x128xf32, #tpu.memory_space<vmem>>, %arg5: memref<1x1x8xf32, #tpu.memory_space<vmem>>, %arg6: memref<8x128xf32, #tpu.memory_space<vmem>>) attributes {dimension_semantics = [#tpu.dimension_semantics<parallel>, #tpu.dimension_semantics<arbitrary>], iteration_bounds = array<i64: 1, 1>, scalar_prefetch = 0 : i64, scratch_operands = 1 : i64, tpu.core_type = #tpu.core_type<tc>, window_params = [{transform_indices = @transform_0, window_bounds = array<i64: 8, 1024>}, {transform_indices = @transform_1, window_bounds = array<i64: 1024, 128>}, {pipeline_mode = #tpu.pipeline_mode<synchronous>, transform_indices = @transform_2, window_bounds = array<i64: 1, 128>}, {transform_indices = @transform_3, window_bounds = array<i64: 1, 1, 8>}]} {
    %c0_i32 = arith.constant 0 : i32
    %0 = arith.cmpi eq, %arg1, %c0_i32 : i32
    %1 = arith.extui %0 : i1 to i32
    %c0_i32_0 = arith.constant 0 : i32
    %2 = arith.cmpi ne, %1, %c0_i32_0 : i32
    scf.if %2 {
      %cst_10 = arith.constant 0.000000e+00 : f32
      %12 = vector.broadcast %cst_10 : f32 to vector<8x128xf32>
      %c0_11 = arith.constant 0 : index
      %c0_12 = arith.constant 0 : index
      %13 = vector.load %arg6[%c0_11, %c0_12] : memref<8x128xf32, #tpu.memory_space<vmem>>, vector<8x128xf32>
      tpu.vector_store %arg6[%c0_11, %c0_12], %12 {strides = array<i32>} : memref<8x128xf32, #tpu.memory_space<vmem>>, vector<8x128xf32>,
    } else {
    }
    %c0 = arith.constant 0 : index
    %c0_1 = arith.constant 0 : index
    %3 = vector.load %arg6[%c0, %c0_1] : memref<8x128xf32, #tpu.memory_space<vmem>>, vector<8x128xf32>
    %c0_2 = arith.constant 0 : index
    %c0_3 = arith.constant 0 : index
    %4 = vector.load %arg2[%c0_2, %c0_3] : memref<8x1024xbf16, #tpu.memory_space<vmem>>, vector<8x1024xbf16>
    %c0_4 = arith.constant 0 : index
    %c0_5 = arith.constant 0 : index
    %5 = vector.load %arg3[%c0_4, %c0_5] : memref<1024x128xbf16, #tpu.memory_space<vmem>>, vector<1024x128xbf16>
    %cst = arith.constant dense<0.000000e+00> : vector<8x128xf32>
    %6 = tpu.matmul %4, %5, %cst {dimension_numbers = #tpu.dot_dimension_numbers<[1], [0], [0], [1], [0, 0, 1, 1], [], []>} : vector<8x1024xbf16>, vector<1024x128xbf16>, vector<8x128xf32> -> vector<8x128xf32>
    %7 = arith.addf %3, %6 : vector<8x128xf32>
    %c0_6 = arith.constant 0 : index
    %c0_7 = arith.constant 0 : index
    %8 = vector.load %arg6[%c0_6, %c0_7] : memref<8x128xf32, #tpu.memory_space<vmem>>, vector<8x128xf32>
    tpu.vector_store %arg6[%c0_6, %c0_7], %7 {strides = array<i32>} : memref<8x128xf32, #tpu.memory_space<vmem>>, vector<8x128xf32>,
    %c0_i32_8 = arith.constant 0 : i32
    %9 = arith.cmpi eq, %arg1, %c0_i32_8 : i32
    %10 = arith.extui %9 : i1 to i32
    %c0_i32_9 = arith.constant 0 : i32
    %11 = arith.cmpi ne, %10, %c0_i32_9 : i32
    scf.if %11 {
      %c0_10 = arith.constant 0 : index
      %c0_11 = arith.constant 0 : index
      %12 = vector.load %arg6[%c0_10, %c0_11] : memref<8x128xf32, #tpu.memory_space<vmem>>, vector<8x128xf32>
      %13 = arith.mulf %12, %12 : vector<8x128xf32>
      %cst_12 = arith.constant dense<0.000000e+00> : vector<8xf32>
      %14 = vector.multi_reduction <add>, %13, %cst_12 [1] : vector<8x128xf32> to vector<8xf32>
      %15 = vector.shape_cast %14 : vector<8xf32> to vector<8x1xf32>
      %cst_13 = arith.constant 9.99999996E-13 : f32
      %16 = vector.broadcast %cst_13 : f32 to vector<8x1xf32>
      %17 = arith.addf %15, %16 : vector<8x1xf32>
      %18 = math.rsqrt %17 : vector<8x1xf32>
      %19 = vector.broadcast %18 : vector<8x1xf32> to vector<8x128xf32>
      %20 = arith.mulf %12, %19 : vector<8x128xf32>
      %c0_14 = arith.constant 0 : index
      %c0_15 = arith.constant 0 : index
      %21 = vector.load %arg4[%c0_14, %c0_15] : memref<1x128xf32, #tpu.memory_space<vmem>>, vector<1x128xf32>
      %cst_16 = arith.constant dense<0.000000e+00> : vector<1x8xf32>
      %22 = tpu.matmul %21, %20, %cst_16 {dimension_numbers = #tpu.dot_dimension_numbers<[1], [1], [0], [0], [0, 0, 1, 0], [], []>} : vector<1x128xf32>, vector<8x128xf32>, vector<1x8xf32> -> vector<1x8xf32>
      %23 = vector.shape_cast %22 : vector<1x8xf32> to vector<1x1x8xf32>
      %c0_17 = arith.constant 0 : index
      %c0_18 = arith.constant 0 : index
      %c0_19 = arith.constant 0 : index
      %24 = vector.load %arg5[%c0_17, %c0_18, %c0_19] : memref<1x1x8xf32, #tpu.memory_space<vmem>>, vector<1x1x8xf32>
      tpu.vector_store %arg5[%c0_17, %c0_18, %c0_19], %23 {strides = array<i32>} : memref<1x1x8xf32, #tpu.memory_space<vmem>>, vector<1x1x8xf32>,
    } else {
    }
    return
  }
  func.func @transform_0(%arg0: i32, %arg1: i32) -> (i32, i32) {
    %c0_i32 = arith.constant 0 : i32
    return %arg0, %arg1 : i32, i32
  }
  func.func @transform_1(%arg0: i32, %arg1: i32) -> (i32, i32) {
    %c0_i32 = arith.constant 0 : i32
    %c0_i32_0 = arith.constant 0 : i32
    return %arg1, %c0_i32 : i32, i32
  }
  func.func @transform_2(%arg0: i32, %arg1: i32) -> (i32, i32) {
    %c0_i32 = arith.constant 0 : i32
    %c0_i32_0 = arith.constant 0 : i32
    %c0_i32_1 = arith.constant 0 : i32
    return %c0_i32, %c0_i32_0 : i32, i32
  }
  func.func @transform_3(%arg0: i32, %arg1: i32) -> (i32, i32, i32) {
    %c0_i32 = arith.constant 0 : i32
    %c0_i32_0 = arith.constant 0 : i32
    %c0_i32_1 = arith.constant 0 : i32
    return %arg0, %c0_i32, %c0_i32_0 : i32, i32, i32
  }
}

</mosaic_0001>

<llo_original>
// kernel: tpu_custom_call.1
$region0: #{tpu_custom_call.1}
  #allocation0 [shape = 'u32[]', space=smem, size = 0x4, offset = 0x4, fixed_abs, tag = 'smem constant byte address 0x4 - core index']
  #allocation1 [shape = 'u32[144,128]{1,0:T(1,128)}', space=vmem, size = 0x12000, scoped, tag = 'internal scratch']
  #allocation2 [shape = 'f32[8,128]{1,0:T(8,128)}', space=vmem, size = 0x1000, scoped, tag = 'scratch operand']
  %s0 = inlined_call_operand.hbm [shape: bf16[8,1024], index: 0, kind: input, shape index: {}]
  %s1 = inlined_call_operand.hbm [shape: bf16[1024,128], index: 1, kind: input, shape index: {}]
  %s2 = inlined_call_operand.vmem [shape: f32[1,128], index: 2, kind: input, shape index: {}]
  %s3 = inlined_call_operand.hbm [shape: f32[1,1,8], index: 3, kind: output, shape index: {}]
  %s4 = sld [smem:[#allocation0]]
  $region38: #{tpu_custom_call.1} parent=0
    _
  %s6 = ssub.s32 1, %s4
  %s7 = scalar_select 0, %s6, %s4
  $region1: #{tpu_custom_call.1} parent=0
    #allocation3 [shape = 'u8[16384]{0}', space=vmem, size = 0x4000, scoped, tag = 'input window, operand 0, single buffered']
    #allocation4 [shape = 's32[1]{0}', space=sflag, size = 0x4, scoped, tag = 'scoped memory for tpu_custom_call.1']
    #allocation5 [shape = 's32[1]{0}', space=sflag, size = 0x4, scoped, tag = 'scoped memory for tpu_custom_call.1']
    #allocation6 [shape = 'u8[262144]{0}', space=vmem, size = 0x40000, scoped, tag = 'input window, operand 1, single buffered']
    #allocation7 [shape = 's32[1]{0}', space=sflag, size = 0x4, scoped, tag = 'scoped memory for tpu_custom_call.1']
    #allocation8 [shape = 'u8[512]{0}', space=vmem, size = 0x400, scoped, tag = 'output window, operand 0, single buffered']
    %8 = vsyncpa [#allocation4], 0
    %9 = vsyncpa [#allocation7], 0
    %10 = vsyncpa [#allocation5], 0
    // Predicated region
    $region2: #{tpu_custom_call.1} parent=1 // pred_check
      _
    $region3: #{tpu_custom_call.1} parent=1 // pred_check_branch
      %12 = sbr.rel (0) target = $region5
    $region4: #{tpu_custom_call.1} parent=1 // pred_region
      %s14 = ssub.s32 512, 512
      %15 = vsyncadd [#allocation4], %s14
      %s17 = sshll.u32 [#allocation3], 4
      %s18 = int_to_ptr.vmem [resolvable:$true] %s17
      %20 = dma.hbm_to_vmem [thread:$0]  %s0, 512, %s18, [#allocation4]
    $region5: #{tpu_custom_call.1} parent=1 // pred_fallthru
      _
    // Predicated region
    $region6: #{tpu_custom_call.1} parent=1 // pred_check
      _
    $region7: #{tpu_custom_call.1} parent=1 // pred_check_branch
      %22 = sbr.rel (0) target = $region9
    $region8: #{tpu_custom_call.1} parent=1 // pred_region
      %s24 = ssub.s32 8192, 8192
      %25 = vsyncadd [#allocation7], %s24
      %s26 = sshll.u32 [#allocation6], 4
      %s27 = int_to_ptr.vmem [resolvable:$true] %s26
      %32 = dma.hbm_to_vmem [thread:$0]  %s1, 8192, %s27, [#allocation7], 64, 64, 4
    $region9: #{tpu_custom_call.1} parent=1 // pred_fallthru
      _
    // Predicated region
    $region10: #{tpu_custom_call.1} parent=1 // pred_check
      _
    $region11: #{tpu_custom_call.1} parent=1 // pred_check_branch
      %34 = sbr.rel (0) target = $region13
    $region12: #{tpu_custom_call.1} parent=1 // pred_region
      _
    $region13: #{tpu_custom_call.1} parent=1 // pred_fallthru
      _
    // Predicated region
    $region14: #{tpu_custom_call.1} parent=1 // pred_check
      _
    $region15: #{tpu_custom_call.1} parent=1 // pred_check_branch
      %36 = sbr.rel (0) target = $region17
    $region16: #{tpu_custom_call.1} parent=1 // pred_region
      %37 = dma.done [#allocation4], 512
    $region17: #{tpu_custom_call.1} parent=1 // pred_fallthru
      _
    // Predicated region
    $region18: #{tpu_custom_call.1} parent=1 // pred_check
      _
    $region19: #{tpu_custom_call.1} parent=1 // pred_check_branch
      %39 = sbr.rel (0) target = $region21
    $region20: #{tpu_custom_call.1} parent=1 // pred_region
      %40 = dma.done [#allocation7], 8192
    $region21: #{tpu_custom_call.1} parent=1 // pred_fallthru
      _
    %p42 = scmp.eq.s32.totalorder 0, 0
    // Predicated region
    $region22: #{tpu_custom_call.1} parent=1 // pred_check
      %p43 = pneg %p42
    $region23: #{tpu_custom_call.1} parent=1 // pred_check_branch
      %45 = sbr.rel (%p43) target = $region25
    $region24: #{tpu_custom_call.1} parent=1 // pred_region
      %46 = vst [vmem:[#allocation2] sm:$0xff] 0.0
    $region25: #{tpu_custom_call.1} parent=1 // pred_fallthru
      _
    %v47 = vld [vmem:[#allocation2] sm:$0xff]
    %v48 = vld [vmem:[#allocation3] sm:$0xff]
    %v49 = vld [vmem:[#allocation3 + $0x8] sm:$0xff]
    %v50 = vld [vmem:[#allocation3 + $0x10] sm:$0xff]
    %v51 = vld [vmem:[#allocation3 + $0x18] sm:$0xff]
    %v52 = vld [vmem:[#allocation6] sm:$0xf]
    %v53 = vld [vmem:[#allocation6 + $0x4] sm:$0xf]
    %v54 = vld [vmem:[#allocation6 + $0x8] sm:$0xf]
    %v55 = vld [vmem:[#allocation6 + $0xc] sm:$0xf]
    %v56 = vld [vmem:[#allocation6 + $0x10] sm:$0xf]
    %v57 = vld [vmem:[#allocation6 + $0x14] sm:$0xf]
    %v58 = vld [vmem:[#allocation6 + $0x18] sm:$0xf]
    %v59 = vld [vmem:[#allocation6 + $0x1c] sm:$0xf]
    %v60 = vld [vmem:[#allocation6 + $0x20] sm:$0xf]
    %v61 = vld [vmem:[#allocation6 + $0x24] sm:$0xf]
    %v62 = vld [vmem:[#allocation6 + $0x28] sm:$0xf]
    %v63 = vld [vmem:[#allocation6 + $0x2c] sm:$0xf]
    %v64 = vld [vmem:[#allocation6 + $0x30] sm:$0xf]
    %v65 = vld [vmem:[#allocation6 + $0x34] sm:$0xf]
    %v66 = vld [vmem:[#allocation6 + $0x38] sm:$0xf]
    %v67 = vld [vmem:[#allocation6 + $0x3c] sm:$0xf]
    %v68 = vld [vmem:[#allocation6 + $0x40] sm:$0xf]
    %v69 = vld [vmem:[#allocation6 + $0x44] sm:$0xf]
    %v70 = vld [vmem:[#allocation6 + $0x48] sm:$0xf]
    %v71 = vld [vmem:[#allocation6 + $0x4c] sm:$0xf]
    %v72 = vld [vmem:[#allocation6 + $0x50] sm:$0xf]
    %v73 = vld [vmem:[#allocation6 + $0x54] sm:$0xf]
    %v74 = vld [vmem:[#allocation6 + $0x58] sm:$0xf]
    %v75 = vld [vmem:[#allocation6 + $0x5c] sm:$0xf]
    %v76 = vld [vmem:[#allocation6 + $0x60] sm:$0xf]
    %v77 = vld [vmem:[#allocation6 + $0x64] sm:$0xf]
    %v78 = vld [vmem:[#allocation6 + $0x68] sm:$0xf]
    %v79 = vld [vmem:[#allocation6 + $0x6c] sm:$0xf]
    %v80 = vld [vmem:[#allocation6 + $0x70] sm:$0xf]
    %v81 = vld [vmem:[#allocation6 + $0x74] sm:$0xf]
    %v82 = vld [vmem:[#allocation6 + $0x78] sm:$0xf]
    %v83 = vld [vmem:[#allocation6 + $0x7c] sm:$0xf]
    %v84 = vld [vmem:[#allocation6 + $0x80] sm:$0xf]
    %v85 = vld [vmem:[#allocation6 + $0x84] sm:$0xf]
    %v86 = vld [vmem:[#allocation6 + $0x88] sm:$0xf]
    %v87 = vld [vmem:[#allocation6 + $0x8c] sm:$0xf]
    %v88 = vld [vmem:[#allocation6 + $0x90] sm:$0xf]
    %v89 = vld [vmem:[#allocation6 + $0x94] sm:$0xf]
    %v90 = vld [vmem:[#allocation6 + $0x98] sm:$0xf]
    %v91 = vld [vmem:[#allocation6 + $0x9c] sm:$0xf]
    %v92 = vld [vmem:[#allocation6 + $0xa0] sm:$0xf]
    %v93 = vld [vmem:[#allocation6 + $0xa4] sm:$0xf]
    %v94 = vld [vmem:[#allocation6 + $0xa8] sm:$0xf]
    %v95 = vld [vmem:[#allocation6 + $0xac] sm:$0xf]
    %v96 = vld [vmem:[#allocation6 + $0xb0] sm:$0xf]
    %v97 = vld [vmem:[#allocation6 + $0xb4] sm:$0xf]
    %v98 = vld [vmem:[#allocation6 + $0xb8] sm:$0xf]
    %v99 = vld [vmem:[#allocation6 + $0xbc] sm:$0xf]
    %v100 = vld [vmem:[#allocation6 + $0xc0] sm:$0xf]
    %v101 = vld [vmem:[#allocation6 + $0xc4] sm:$0xf]
    %v102 = vld [vmem:[#allocation6 + $0xc8] sm:$0xf]
    %v103 = vld [vmem:[#allocation6 + $0xcc] sm:$0xf]
    %v104 = vld [vmem:[#allocation6 + $0xd0] sm:$0xf]
    %v105 = vld [vmem:[#allocation6 + $0xd4] sm:$0xf]
    %v106 = vld [vmem:[#allocation6 + $0xd8] sm:$0xf]
    %v107 = vld [vmem:[#allocation6 + $0xdc] sm:$0xf]
    %v108 = vld [vmem:[#allocation6 + $0xe0] sm:$0xf]
    %v109 = vld [vmem:[#allocation6 + $0xe4] sm:$0xf]
    %v110 = vld [vmem:[#allocation6 + $0xe8] sm:$0xf]
    %v111 = vld [vmem:[#allocation6 + $0xec] sm:$0xf]
    %v112 = vld [vmem:[#allocation6 + $0xf0] sm:$0xf]
    %v113 = vld [vmem:[#allocation6 + $0xf4] sm:$0xf]
    %v114 = vld [vmem:[#allocation6 + $0xf8] sm:$0xf]
    %v115 = vld [vmem:[#allocation6 + $0xfc] sm:$0xf]
    %v116 = vld [vmem:[#allocation6 + $0x100] sm:$0xf]
    %v117 = vld [vmem:[#allocation6 + $0x104] sm:$0xf]
    %v118 = vld [vmem:[#allocation6 + $0x108] sm:$0xf]
    %v119 = vld [vmem:[#allocation6 + $0x10c] sm:$0xf]
    %v120 = vld [vmem:[#allocation6 + $0x110] sm:$0xf]
    %v121 = vld [vmem:[#allocation6 + $0x114] sm:$0xf]
    %v122 = vld [vmem:[#allocation6 + $0x118] sm:$0xf]
    %v123 = vld [vmem:[#allocation6 + $0x11c] sm:$0xf]
    %v124 = vld [vmem:[#allocation6 + $0x120] sm:$0xf]
    %v125 = vld [vmem:[#allocation6 + $0x124] sm:$0xf]
    %v126 = vld [vmem:[#allocation6 + $0x128] sm:$0xf]
    %v127 = vld [vmem:[#allocation6 + $0x12c] sm:$0xf]
    %v128 = vld [vmem:[#allocation6 + $0x130] sm:$0xf]
    %v129 = vld [vmem:[#allocation6 + $0x134] sm:$0xf]
    %v130 = vld [vmem:[#allocation6 + $0x138] sm:$0xf]
    %v131 = vld [vmem:[#allocation6 + $0x13c] sm:$0xf]
    %v132 = vld [vmem:[#allocation6 + $0x140] sm:$0xf]
    %v133 = vld [vmem:[#allocation6 + $0x144] sm:$0xf]
    %v134 = vld [vmem:[#allocation6 + $0x148] sm:$0xf]
    %v135 = vld [vmem:[#allocation6 + $0x14c] sm:$0xf]
    %v136 = vld [vmem:[#allocation6 + $0x150] sm:$0xf]
    %v137 = vld [vmem:[#allocation6 + $0x154] sm:$0xf]
    %v138 = vld [vmem:[#allocation6 + $0x158] sm:$0xf]
    %v139 = vld [vmem:[#allocation6 + $0x15c] sm:$0xf]
    %v140 = vld [vmem:[#allocation6 + $0x160] sm:$0xf]
    %v141 = vld [vmem:[#allocation6 + $0x164] sm:$0xf]
    %v142 = vld [vmem:[#allocation6 + $0x168] sm:$0xf]
    %v143 = vld [vmem:[#allocation6 + $0x16c] sm:$0xf]
    %v144 = vld [vmem:[#allocation6 + $0x170] sm:$0xf]
    %v145 = vld [vmem:[#allocation6 + $0x174] sm:$0xf]
    %v146 = vld [vmem:[#allocation6 + $0x178] sm:$0xf]
    %v147 = vld [vmem:[#allocation6 + $0x17c] sm:$0xf]
    %v148 = vld [vmem:[#allocation6 + $0x180] sm:$0xf]
    %v149 = vld [vmem:[#allocation6 + $0x184] sm:$0xf]
    %v150 = vld [vmem:[#allocation6 + $0x188] sm:$0xf]
    %v151 = vld [vmem:[#allocation6 + $0x18c] sm:$0xf]
    %v152 = vld [vmem:[#allocation6 + $0x190] sm:$0xf]
    %v153 = vld [vmem:[#allocation6 + $0x194] sm:$0xf]
    %v154 = vld [vmem:[#allocation6 + $0x198] sm:$0xf]
    %v155 = vld [vmem:[#allocation6 + $0x19c] sm:$0xf]
    %v156 = vld [vmem:[#allocation6 + $0x1a0] sm:$0xf]
    %v157 = vld [vmem:[#allocation6 + $0x1a4] sm:$0xf]
    %v158 = vld [vmem:[#allocation6 + $0x1a8] sm:$0xf]
    %v159 = vld [vmem:[#allocation6 + $0x1ac] sm:$0xf]
    %v160 = vld [vmem:[#allocation6 + $0x1b0] sm:$0xf]
    %v161 = vld [vmem:[#allocation6 + $0x1b4] sm:$0xf]
    %v162 = vld [vmem:[#allocation6 + $0x1b8] sm:$0xf]
    %v163 = vld [vmem:[#allocation6 + $0x1bc] sm:$0xf]
    %v164 = vld [vmem:[#allocation6 + $0x1c0] sm:$0xf]
    %v165 = vld [vmem:[#allocation6 + $0x1c4] sm:$0xf]
    %v166 = vld [vmem:[#allocation6 + $0x1c8] sm:$0xf]
    %v167 = vld [vmem:[#allocation6 + $0x1cc] sm:$0xf]
    %v168 = vld [vmem:[#allocation6 + $0x1d0] sm:$0xf]
    %v169 = vld [vmem:[#allocation6 + $0x1d4] sm:$0xf]
    %v170 = vld [vmem:[#allocation6 + $0x1d8] sm:$0xf]
    %v171 = vld [vmem:[#allocation6 + $0x1dc] sm:$0xf]
    %v172 = vld [vmem:[#allocation6 + $0x1e0] sm:$0xf]
    %v173 = vld [vmem:[#allocation6 + $0x1e4] sm:$0xf]
    %v174 = vld [vmem:[#allocation6 + $0x1e8] sm:$0xf]
    %v175 = vld [vmem:[#allocation6 + $0x1ec] sm:$0xf]
    %v176 = vld [vmem:[#allocation6 + $0x1f0] sm:$0xf]
    %v177 = vld [vmem:[#allocation6 + $0x1f4] sm:$0xf]
    %v178 = vld [vmem:[#allocation6 + $0x1f8] sm:$0xf]
    %v179 = vld [vmem:[#allocation6 + $0x1fc] sm:$0xf]
    %v184 = vunpack.c.l.b16 %v48
    %v185 = vunpack.c.h.b16 %v48
    %v186 = vunpack.c.l.b16 %v49
    %v187 = vunpack.c.h.b16 %v49
    %v188 = vunpack.c.l.b16 %v50
    %v189 = vunpack.c.h.b16 %v50
    %v190 = vunpack.c.l.b16 %v51
    %v191 = vunpack.c.h.b16 %v51
    %v192 = vpack.c.b16 %v184, %v184
    %v193 = vpack.c.b16 %v185, %v185
    %v194 = vpack.c.b16 %v186, %v186
    %v195 = vpack.c.b16 %v187, %v187
    %v196 = vpack.c.b16 %v188, %v188
    %v197 = vpack.c.b16 %v189, %v189
    %v198 = vpack.c.b16 %v190, %v190
    %v199 = vpack.c.b16 %v191, %v191
    %v336 = vunpack.c.l.b16 %v52
    %v337 = vunpack.c.l.b16 %v53
    %v338 = vunpack.c.l.b16 %v54
    %v339 = vunpack.c.l.b16 %v55
    %v340 = vunpack.c.l.b16 %v56
    %v341 = vunpack.c.l.b16 %v57
    %v342 = vunpack.c.l.b16 %v58
    %v343 = vunpack.c.l.b16 %v59
    %v344 = vunpack.c.l.b16 %v60
    %v345 = vunpack.c.l.b16 %v61
    %v346 = vunpack.c.l.b16 %v62
    %v347 = vunpack.c.l.b16 %v63
    %v348 = vunpack.c.l.b16 %v64
    %v349 = vunpack.c.l.b16 %v65
    %v350 = vunpack.c.l.b16 %v66
    %v351 = vunpack.c.l.b16 %v67
    %v352 = vunpack.c.l.b16 %v68
    %v353 = vunpack.c.l.b16 %v69
    %v354 = vunpack.c.l.b16 %v70
    %v355 = vunpack.c.l.b16 %v71
    %v356 = vunpack.c.l.b16 %v72
    %v357 = vunpack.c.l.b16 %v73
    %v358 = vunpack.c.l.b16 %v74
    %v359 = vunpack.c.l.b16 %v75
    %v360 = vunpack.c.l.b16 %v76
    %v361 = vunpack.c.l.b16 %v77
    %v362 = vunpack.c.l.b16 %v78
    %v363 = vunpack.c.l.b16 %v79
    %v364 = vunpack.c.l.b16 %v80
    %v365 = vunpack.c.l.b16 %v81
    %v366 = vunpack.c.l.b16 %v82
    %v367 = vunpack.c.l.b16 %v83
    %v368 = vunpack.c.l.b16 %v84
    %v369 = vunpack.c.l.b16 %v85
    %v370 = vunpack.c.l.b16 %v86
    %v371 = vunpack.c.l.b16 %v87
    %v372 = vunpack.c.l.b16 %v88
    %v373 = vunpack.c.l.b16 %v89
    %v374 = vunpack.c.l.b16 %v90
    %v375 = vunpack.c.l.b16 %v91
    %v376 = vunpack.c.l.b16 %v92
    %v377 = vunpack.c.l.b16 %v93
    %v378 = vunpack.c.l.b16 %v94
    %v379 = vunpack.c.l.b16 %v95
    %v380 = vunpack.c.l.b16 %v96
    %v381 = vunpack.c.l.b16 %v97
    %v382 = vunpack.c.l.b16 %v98
    %v383 = vunpack.c.l.b16 %v99
    %v384 = vunpack.c.l.b16 %v100
    %v385 = vunpack.c.l.b16 %v101
    %v386 = vunpack.c.l.b16 %v102
    %v387 = vunpack.c.l.b16 %v103
    %v388 = vunpack.c.l.b16 %v104
    %v389 = vunpack.c.l.b16 %v105
    %v390 = vunpack.c.l.b16 %v106
    %v391 = vunpack.c.l.b16 %v107
    %v392 = vunpack.c.l.b16 %v108
    %v393 = vunpack.c.l.b16 %v109
    %v394 = vunpack.c.l.b16 %v110
    %v395 = vunpack.c.l.b16 %v111
    %v396 = vunpack.c.l.b16 %v112
    %v397 = vunpack.c.l.b16 %v113
    %v398 = vunpack.c.l.b16 %v114
    %v399 = vunpack.c.l.b16 %v115
    %v400 = vunpack.c.l.b16 %v116
    %v401 = vunpack.c.l.b16 %v117
    %v402 = vunpack.c.l.b16 %v118
    %v403 = vunpack.c.l.b16 %v119
    %v404 = vunpack.c.l.b16 %v120
    %v405 = vunpack.c.l.b16 %v121
    %v406 = vunpack.c.l.b16 %v122
    %v407 = vunpack.c.l.b16 %v123
    %v408 = vunpack.c.l.b16 %v124
    %v409 = vunpack.c.l.b16 %v125
    %v410 = vunpack.c.l.b16 %v126
    %v411 = vunpack.c.l.b16 %v127
    %v412 = vunpack.c.l.b16 %v128
    %v413 = vunpack.c.l.b16 %v129
    %v414 = vunpack.c.l.b16 %v130
    %v415 = vunpack.c.l.b16 %v131
    %v416 = vunpack.c.l.b16 %v132
    %v417 = vunpack.c.l.b16 %v133
    %v418 = vunpack.c.l.b16 %v134
    %v419 = vunpack.c.l.b16 %v135
    %v420 = vunpack.c.l.b16 %v136
    %v421 = vunpack.c.l.b16 %v137
    %v422 = vunpack.c.l.b16 %v138
    %v423 = vunpack.c.l.b16 %v139
    %v424 = vunpack.c.l.b16 %v140
    %v425 = vunpack.c.l.b16 %v141
    %v426 = vunpack.c.l.b16 %v142
    %v427 = vunpack.c.l.b16 %v143
    %v428 = vunpack.c.l.b16 %v144
    %v429 = vunpack.c.l.b16 %v145
    %v430 = vunpack.c.l.b16 %v146
    %v431 = vunpack.c.l.b16 %v147
    %v432 = vunpack.c.l.b16 %v148
    %v433 = vunpack.c.l.b16 %v149
    %v434 = vunpack.c.l.b16 %v150
    %v435 = vunpack.c.l.b16 %v151
    %v436 = vunpack.c.l.b16 %v152
    %v437 = vunpack.c.l.b16 %v153
    %v438 = vunpack.c.l.b16 %v154
    %v439 = vunpack.c.l.b16 %v155
    %v440 = vunpack.c.l.b16 %v156
    %v441 = vunpack.c.l.b16 %v157
    %v442 = vunpack.c.l.b16 %v158
    %v443 = vunpack.c.l.b16 %v159
    %v444 = vunpack.c.l.b16 %v160
    %v445 = vunpack.c.l.b16 %v161
    %v446 = vunpack.c.l.b16 %v162
    %v447 = vunpack.c.l.b16 %v163
    %v448 = vunpack.c.l.b16 %v164
    %v449 = vunpack.c.l.b16 %v165
    %v450 = vunpack.c.l.b16 %v166
    %v451 = vunpack.c.l.b16 %v167
    %v452 = vunpack.c.l.b16 %v168
    %v453 = vunpack.c.l.b16 %v169
    %v454 = vunpack.c.l.b16 %v170
    %v455 = vunpack.c.l.b16 %v171
    %v456 = vunpack.c.l.b16 %v172
    %v457 = vunpack.c.l.b16 %v173
    %v458 = vunpack.c.l.b16 %v174
    %v459 = vunpack.c.l.b16 %v175
    %v460 = vunpack.c.l.b16 %v176
    %v461 = vunpack.c.l.b16 %v177
    %v462 = vunpack.c.l.b16 %v178
    %v463 = vunpack.c.l.b16 %v179
    %v464 = vpack.c.b16 %v337, %v336
    %v465 = vpack.c.b16 %v339, %v338
    %v466 = vpack.c.b16 %v341, %v340
    %v467 = vpack.c.b16 %v343, %v342
    %v468 = vpack.c.b16 %v345, %v344
    %v469 = vpack.c.b16 %v347, %v346
    %v470 = vpack.c.b16 %v349, %v348
    %v471 = vpack.c.b16 %v351, %v350
    %v472 = vpack.c.b16 %v353, %v352
    %v473 = vpack.c.b16 %v355, %v354
    %v474 = vpack.c.b16 %v357, %v356
    %v475 = vpack.c.b16 %v359, %v358
    %v476 = vpack.c.b16 %v361, %v360
    %v477 = vpack.c.b16 %v363, %v362
    %v478 = vpack.c.b16 %v365, %v364
    %v479 = vpack.c.b16 %v367, %v366
    %v480 = vpack.c.b16 %v369, %v368
    %v481 = vpack.c.b16 %v371, %v370
    %v482 = vpack.c.b16 %v373, %v372
    %v483 = vpack.c.b16 %v375, %v374
    %v484 = vpack.c.b16 %v377, %v376
    %v485 = vpack.c.b16 %v379, %v378
    %v486 = vpack.c.b16 %v381, %v380
    %v487 = vpack.c.b16 %v383, %v382
    %v488 = vpack.c.b16 %v385, %v384
    %v489 = vpack.c.b16 %v387, %v386
    %v490 = vpack.c.b16 %v389, %v388
    %v491 = vpack.c.b16 %v391, %v390
    %v492 = vpack.c.b16 %v393, %v392
    %v493 = vpack.c.b16 %v395, %v394
    %v494 = vpack.c.b16 %v397, %v396
    %v495 = vpack.c.b16 %v399, %v398
    %v496 = vpack.c.b16 %v401, %v400
    %v497 = vpack.c.b16 %v403, %v402
    %v498 = vpack.c.b16 %v405, %v404
    %v499 = vpack.c.b16 %v407, %v406
    %v500 = vpack.c.b16 %v409, %v408
    %v501 = vpack.c.b16 %v411, %v410
    %v502 = vpack.c.b16 %v413, %v412
    %v503 = vpack.c.b16 %v415, %v414
    %v504 = vpack.c.b16 %v417, %v416
    %v505 = vpack.c.b16 %v419, %v418
    %v506 = vpack.c.b16 %v421, %v420
    %v507 = vpack.c.b16 %v423, %v422
    %v508 = vpack.c.b16 %v425, %v424
    %v509 = vpack.c.b16 %v427, %v426
    %v510 = vpack.c.b16 %v429, %v428
    %v511 = vpack.c.b16 %v431, %v430
    %v512 = vpack.c.b16 %v433, %v432
    %v513 = vpack.c.b16 %v435, %v434
    %v514 = vpack.c.b16 %v437, %v436
    %v515 = vpack.c.b16 %v439, %v438
    %v516 = vpack.c.b16 %v441, %v440
    %v517 = vpack.c.b16 %v443, %v442
    %v518 = vpack.c.b16 %v445, %v444
    %v519 = vpack.c.b16 %v447, %v446
    %v520 = vpack.c.b16 %v449, %v448
    %v521 = vpack.c.b16 %v451, %v450
    %v522 = vpack.c.b16 %v453, %v452
    %v523 = vpack.c.b16 %v455, %v454
    %v524 = vpack.c.b16 %v457, %v456
    %v525 = vpack.c.b16 %v459, %v458
    %v526 = vpack.c.b16 %v461, %v460
    %v527 = vpack.c.b16 %v463, %v462
    %592 = vmatprep.subr.bf16.mxu0 0
    %593 = vmatpush1.bf16.msra.mxu0 %v464
    %594 = vmatprep.subr.bf16.mxu0 0
    %595 = vmatpush1.bf16.msra.mxu0 %v465
    %596 = vmatprep.subr.bf16.mxu0 0
    %597 = vmatpush1.bf16.msra.mxu0 %v466
    %598 = vmatprep.subr.bf16.mxu0 0
    %599 = vmatpush1.bf16.msra.mxu0 %v467
    %600 = vmatprep.subr.bf16.mxu0 0
    %601 = vmatpush1.bf16.msra.mxu0 %v468
    %602 = vmatprep.subr.bf16.mxu0 0
    %603 = vmatpush1.bf16.msra.mxu0 %v469
    %604 = vmatprep.subr.bf16.mxu0 0
    %605 = vmatpush1.bf16.msra.mxu0 %v470
    %606 = vmatprep.subr.bf16.mxu0 0
    %607 = vmatpush1.bf16.msra.mxu0 %v471
    %608 = vmatprep.subr.bf16.mxu0 0
    %609 = vmatpush1.bf16.msra.mxu0 %v472
    %610 = vmatprep.subr.bf16.mxu0 0
    %611 = vmatpush1.bf16.msra.mxu0 %v473
    %612 = vmatprep.subr.bf16.mxu0 0
    %613 = vmatpush1.bf16.msra.mxu0 %v474
    %614 = vmatprep.subr.bf16.mxu0 0
    %615 = vmatpush1.bf16.msra.mxu0 %v475
    %616 = vmatprep.subr.bf16.mxu0 0
    %617 = vmatpush1.bf16.msra.mxu0 %v476
    %618 = vmatprep.subr.bf16.mxu0 0
    %619 = vmatpush1.bf16.msra.mxu0 %v477
    %620 = vmatprep.subr.bf16.mxu0 0
    %621 = vmatpush1.bf16.msra.mxu0 %v478
    %622 = vmatprep.subr.bf16.mxu0 0
    %623 = vmatpush1.bf16.msra.mxu0 %v479
    %624 = vmatprep.mubr.bf16.mxu0 %v193
    %625 = vmatmul.mubr.bf16.gmra.mrb[0].mxu0 %v192
    %v626 = vpop.f32.mrb[0].mxu0
    %v627 = vadd.f32 0.0, %v626
    %v628 = vpop.f32.mrb[0].mxu0
    %v629 = vpop.f32.mrb[0].mxu0
    %v630 = vpop.f32.mrb[0].mxu0
    %631 = vdwg.mxu0
    %632 = vmatprep.subr.bf16.mxu0 0
    %633 = vmatpush1.bf16.msra.mxu0 %v480
    %634 = vmatprep.subr.bf16.mxu0 0
    %635 = vmatpush1.bf16.msra.mxu0 %v481
    %636 = vmatprep.subr.bf16.mxu0 0
    %637 = vmatpush1.bf16.msra.mxu0 %v482
    %638 = vmatprep.subr.bf16.mxu0 0
    %639 = vmatpush1.bf16.msra.mxu0 %v483
    %640 = vmatprep.subr.bf16.mxu0 0
    %641 = vmatpush1.bf16.msra.mxu0 %v484
    %642 = vmatprep.subr.bf16.mxu0 0
    %643 = vmatpush1.bf16.msra.mxu0 %v485
    %644 = vmatprep.subr.bf16.mxu0 0
    %645 = vmatpush1.bf16.msra.mxu0 %v486
    %646 = vmatprep.subr.bf16.mxu0 0
    %647 = vmatpush1.bf16.msra.mxu0 %v487
    %648 = vmatprep.subr.bf16.mxu0 0
    %649 = vmatpush1.bf16.msra.mxu0 %v488
    %650 = vmatprep.subr.bf16.mxu0 0
    %651 = vmatpush1.bf16.msra.mxu0 %v489
    %652 = vmatprep.subr.bf16.mxu0 0
    %653 = vmatpush1.bf16.msra.mxu0 %v490
    %654 = vmatprep.subr.bf16.mxu0 0
    %655 = vmatpush1.bf16.msra.mxu0 %v491
    %656 = vmatprep.subr.bf16.mxu0 0
    %657 = vmatpush1.bf16.msra.mxu0 %v492
    %658 = vmatprep.subr.bf16.mxu0 0
    %659 = vmatpush1.bf16.msra.mxu0 %v493
    %660 = vmatprep.subr.bf16.mxu0 0
    %661 = vmatpush1.bf16.msra.mxu0 %v494
    %662 = vmatprep.subr.bf16.mxu0 0
    %663 = vmatpush1.bf16.msra.mxu0 %v495
    %664 = vmatprep.mubr.bf16.mxu0 %v195
    %665 = vmatmul.mubr.bf16.gmra.mrb[0].mxu0 %v194
    %v666 = vpop.f32.mrb[0].mxu0
    %v667 = vadd.f32 %v627, %v666
    %v668 = vpop.f32.mrb[0].mxu0
    %v669 = vpop.f32.mrb[0].mxu0
    %v670 = vpop.f32.mrb[0].mxu0
    %671 = vdwg.mxu0
    %672 = vmatprep.subr.bf16.mxu0 0
    %673 = vmatpush1.bf16.msra.mxu0 %v496
    %674 = vmatprep.subr.bf16.mxu0 0
    %675 = vmatpush1.bf16.msra.mxu0 %v497
    %676 = vmatprep.subr.bf16.mxu0 0
    %677 = vmatpush1.bf16.msra.mxu0 %v498
    %678 = vmatprep.subr.bf16.mxu0 0
    %679 = vmatpush1.bf16.msra.mxu0 %v499
    %680 = vmatprep.subr.bf16.mxu0 0
    %681 = vmatpush1.bf16.msra.mxu0 %v500
    %682 = vmatprep.subr.bf16.mxu0 0
    %683 = vmatpush1.bf16.msra.mxu0 %v501
    %684 = vmatprep.subr.bf16.mxu0 0
    %685 = vmatpush1.bf16.msra.mxu0 %v502
    %686 = vmatprep.subr.bf16.mxu0 0
    %687 = vmatpush1.bf16.msra.mxu0 %v503
    %688 = vmatprep.subr.bf16.mxu0 0
    %689 = vmatpush1.bf16.msra.mxu0 %v504
    %690 = vmatprep.subr.bf16.mxu0 0
    %691 = vmatpush1.bf16.msra.mxu0 %v505
    %692 = vmatprep.subr.bf16.mxu0 0
    %693 = vmatpush1.bf16.msra.mxu0 %v506
    %694 = vmatprep.subr.bf16.mxu0 0
    %695 = vmatpush1.bf16.msra.mxu0 %v507
    %696 = vmatprep.subr.bf16.mxu0 0
    %697 = vmatpush1.bf16.msra.mxu0 %v508
    %698 = vmatprep.subr.bf16.mxu0 0
    %699 = vmatpush1.bf16.msra.mxu0 %v509
    %700 = vmatprep.subr.bf16.mxu0 0
    %701 = vmatpush1.bf16.msra.mxu0 %v510
    %702 = vmatprep.subr.bf16.mxu0 0
    %703 = vmatpush1.bf16.msra.mxu0 %v511
    %704 = vmatprep.mubr.bf16.mxu0 %v197
    %705 = vmatmul.mubr.bf16.gmra.mrb[0].mxu0 %v196
    %v706 = vpop.f32.mrb[0].mxu0
    %v707 = vadd.f32 %v667, %v706
    %v708 = vpop.f32.mrb[0].mxu0
    %v709 = vpop.f32.mrb[0].mxu0
    %v710 = vpop.f32.mrb[0].mxu0
    %711 = vdwg.mxu0
    %712 = vmatprep.subr.bf16.mxu0 0
    %713 = vmatpush1.bf16.msra.mxu0 %v512
    %714 = vmatprep.subr.bf16.mxu0 0
    %715 = vmatpush1.bf16.msra.mxu0 %v513
    %716 = vmatprep.subr.bf16.mxu0 0
    %717 = vmatpush1.bf16.msra.mxu0 %v514
    %718 = vmatprep.subr.bf16.mxu0 0
    %719 = vmatpush1.bf16.msra.mxu0 %v515
    %720 = vmatprep.subr.bf16.mxu0 0
    %721 = vmatpush1.bf16.msra.mxu0 %v516
    %722 = vmatprep.subr.bf16.mxu0 0
    %723 = vmatpush1.bf16.msra.mxu0 %v517
    %724 = vmatprep.subr.bf16.mxu0 0
    %725 = vmatpush1.bf16.msra.mxu0 %v518
    %726 = vmatprep.subr.bf16.mxu0 0
    %727 = vmatpush1.bf16.msra.mxu0 %v519
    %728 = vmatprep.subr.bf16.mxu0 0
    %729 = vmatpush1.bf16.msra.mxu0 %v520
    %730 = vmatprep.subr.bf16.mxu0 0
    %731 = vmatpush1.bf16.msra.mxu0 %v521
    %732 = vmatprep.subr.bf16.mxu0 0
    %733 = vmatpush1.bf16.msra.mxu0 %v522
    %734 = vmatprep.subr.bf16.mxu0 0
    %735 = vmatpush1.bf16.msra.mxu0 %v523
    %736 = vmatprep.subr.bf16.mxu0 0
    %737 = vmatpush1.bf16.msra.mxu0 %v524
    %738 = vmatprep.subr.bf16.mxu0 0
    %739 = vmatpush1.bf16.msra.mxu0 %v525
    %740 = vmatprep.subr.bf16.mxu0 0
    %741 = vmatpush1.bf16.msra.mxu0 %v526
    %742 = vmatprep.subr.bf16.mxu0 0
    %743 = vmatpush1.bf16.msra.mxu0 %v527
    %744 = vmatprep.mubr.bf16.mxu0 %v199
    %745 = vmatmul.mubr.bf16.gmra.mrb[0].mxu0 %v198
    %v746 = vpop.f32.mrb[0].mxu0
    %v747 = vadd.f32 %v707, %v746
    %v748 = vpop.f32.mrb[0].mxu0
    %v749 = vpop.f32.mrb[0].mxu0
    %v750 = vpop.f32.mrb[0].mxu0
    %751 = vdwg.mxu0
    %v752 = vadd.f32 %v47, %v747
    %753 = vst [vmem:[#allocation2] sm:$0xff] %v752
    // Predicated region
    $region26: #{tpu_custom_call.1} parent=1 // pred_check
      %p754 = pneg %p42
    $region27: #{tpu_custom_call.1} parent=1 // pred_check_branch
      %756 = sbr.rel (%p754) target = $region29
    $region28: #{tpu_custom_call.1} parent=1 // pred_region
      %v757 = vld [vmem:[#allocation2] sm:$0xff]
      %v758 = vmul.f32 %v757, %v757
      %759 = vadd.xlane.f32.xlu0 %v758
      %v760 = vpop.xlane.xlu0 %759
      %v761 = vadd.f32 %v760, 1e-12
      %v762 = vrsqrt.pop %v761
      %v763 = vmul.f32 %v757, %v762
      %v764 = vld [vmem:[%s2] sm:$0x1]
      %765 = vmatprep.subr.mxu0 0.0
      %766 = vmatpush1.xpose.msra.mxu0 %v763
      %767 = vmatprep.subr.mxu0 0.0
      %768 = vmatpush1.xpose.msra.mxu0 0.0
      %769 = vmatprep.subr.mxu0 0.0
      %770 = vmatpush1.xpose.msra.mxu0 0.0
      %771 = vmatprep.subr.mxu0 0.0
      %772 = vmatpush1.xpose.msra.mxu0 0.0
      %773 = vmatprep.subr.mxu0 0.0
      %774 = vmatpush1.xpose.msra.mxu0 0.0
      %775 = vmatprep.subr.mxu0 0.0
      %776 = vmatpush1.xpose.msra.mxu0 0.0
      %777 = vmatprep.subr.mxu0 0.0
      %778 = vmatpush1.xpose.msra.mxu0 0.0
      %779 = vmatprep.subr.mxu0 0.0
      %780 = vmatpush1.xpose.msra.mxu0 0.0
      %781 = vmatprep.subr.mxu0 0.0
      %782 = vmatpush1.xpose.msra.mxu0 0.0
      %783 = vmatprep.subr.mxu0 0.0
      %784 = vmatpush1.xpose.msra.mxu0 0.0
      %785 = vmatprep.subr.mxu0 0.0
      %786 = vmatpush1.xpose.msra.mxu0 0.0
      %787 = vmatprep.subr.mxu0 0.0
      %788 = vmatpush1.xpose.msra.mxu0 0.0
      %789 = vmatprep.subr.mxu0 0.0
      %790 = vmatpush1.xpose.msra.mxu0 0.0
      %791 = vmatprep.subr.mxu0 0.0
      %792 = vmatpush1.xpose.msra.mxu0 0.0
      %793 = vmatprep.subr.mxu0 0.0
      %794 = vmatpush1.xpose.msra.mxu0 0.0
      %795 = vmatprep.subr.mxu0 0.0
      %796 = vmatpush1.xpose.msra.mxu0 0.0
      %797 = vmatprep.subr.mxu0 0.0
      %798 = vmatpush1.xpose.msra.mxu0 0.0
      %799 = vmatprep.subr.mxu0 0.0
      %800 = vmatpush1.xpose.msra.mxu0 0.0
      %801 = vmatprep.subr.mxu0 0.0
      %802 = vmatpush1.xpose.msra.mxu0 0.0
      %803 = vmatprep.subr.mxu0 0.0
      %804 = vmatpush1.xpose.msra.mxu0 0.0
      %805 = vmatprep.subr.mxu0 0.0
      %806 = vmatpush1.xpose.msra.mxu0 0.0
      %807 = vmatprep.subr.mxu0 0.0
      %808 = vmatpush1.xpose.msra.mxu0 0.0
      %809 = vmatprep.subr.mxu0 0.0
      %810 = vmatpush1.xpose.msra.mxu0 0.0
      %811 = vmatprep.subr.mxu0 0.0
      %812 = vmatpush1.xpose.msra.mxu0 0.0
      %813 = vmatprep.subr.mxu0 0.0
      %814 = vmatpush1.xpose.msra.mxu0 0.0
      %815 = vmatprep.subr.mxu0 0.0
      %816 = vmatpush1.xpose.msra.mxu0 0.0
      %817 = vmatprep.subr.mxu0 0.0
      %818 = vmatpush1.xpose.msra.mxu0 0.0
      %819 = vmatprep.subr.mxu0 0.0
      %820 = vmatpush1.xpose.msra.mxu0 0.0
      %821 = vmatprep.subr.mxu0 0.0
      %822 = vmatpush1.xpose.msra.mxu0 0.0
      %823 = vmatprep.subr.mxu0 0.0
      %824 = vmatpush1.xpose.msra.mxu0 0.0
      %825 = vmatprep.subr.mxu0 0.0
      %826 = vmatpush1.xpose.msra.mxu0 0.0
      %827 = vmatprep.subr.mxu0 0.0
      %828 = vmatpush1.xpose.msra.mxu0 0.0
      %829 = vmatprep.mubr.f32.mxu0 0.0
      %830 = vmatmul.mubr.f32.gmra.mrb[0].mxu0 %v764
      %v831 = vpop.f32.mrb[0].mxu0
      %v832 = vadd.f32 0.0, %v831
      %v833 = vpop.f32.mrb[0].mxu0
      %834 = vdwg.mxu0
      %vm835 = vcmask 57344
      %836 = vst.msk [vmem:[#allocation8] sm:$0x1] %vm835, %v832
    $region29: #{tpu_custom_call.1} parent=1 // pred_fallthru
      _
    // Predicated region
    $region30: #{tpu_custom_call.1} parent=1 // pred_check
      _
    $region31: #{tpu_custom_call.1} parent=1 // pred_check_branch
      %838 = sbr.rel (0) target = $region33
    $region32: #{tpu_custom_call.1} parent=1 // pred_region
      %s840 = ssub.s32 16, 16
      %841 = vsyncadd [#allocation5], %s840
      %s843 = sshll.u32 [#allocation8], 4
      %s844 = int_to_ptr.vmem [resolvable:$true] %s843
      %846 = dma.vmem_to_hbm [thread:$0]  %s844, 16, %s3, [#allocation5]
    $region33: #{tpu_custom_call.1} parent=1 // pred_fallthru
      _
    // Predicated region
    $region34: #{tpu_custom_call.1} parent=1 // pred_check
      _
    $region35: #{tpu_custom_call.1} parent=1 // pred_check_branch
      %848 = sbr.rel (0) target = $region37
    $region36: #{tpu_custom_call.1} parent=1 // pred_region
      %849 = dma.done [#allocation5], 16
    $region37: #{tpu_custom_call.1} parent=1 // pred_fallthru
      _
    %850 = vsyncpa [#allocation4], 1
    %851 = vsyncpa [#allocation7], 1
    %852 = vsyncpa [#allocation5], 1

</llo_original>
